<compile_context>
chip_gen: v6e
topology: v6e:2x2x1
jax: 0.10.0
libtpu: 0.0.40
codegen_flags: <defaults>
</compile_context>

<pallas_src>
import jax
import jax.numpy as jnp
from jax.experimental import pallas as pl
from jax.experimental.pallas import tpu as pltpu

NOISE_DIM = 32
HIDDEN_DIM = 128
IMAGE_DIM = 28 * 28 * 1          # 784

_MIN_TM = 16                     # bf16 sublane packing for the x tile
_MAX_TM = 1024                   # ~7 MiB double-buffered output tile; fits all gens


def _cdiv(a, b):
    return -(-a // b)


def _round_up(x, m):
    return _cdiv(x, m) * m


def _choose_tiling(B):
    """Pick (TM, B_pad): >=2 grid steps when possible, TM<=1024, TM%16==0,
    minimal batch padding."""
    if B <= _MIN_TM:
        return _MIN_TM, _MIN_TM
    n_tiles = max(2, _cdiv(B, _MAX_TM))          # >=2 steps for megacore sharding
    TM = min(_MAX_TM, _round_up(_cdiv(B, n_tiles), _MIN_TM))
    B_pad = _round_up(B, TM)
    return TM, B_pad


def generator_kernel(x_ref, w1_ref, b1_ref, w2_ref, b2_ref, out_ref):
    # x tile is f32 in VMEM; cast to bf16 for the MXU (f32 accumulation).
    x = x_ref[...].astype(jnp.bfloat16)
    h = jnp.dot(x, w1_ref[...], preferred_element_type=jnp.float32)
    h = h + b1_ref[...]                               # bias add in f32
    h = jnp.where(h >= 0.0, h, 0.01 * h)              # LeakyReLU(0.01) in f32
    o = jnp.dot(h.astype(jnp.bfloat16), w2_ref[...],
                preferred_element_type=jnp.float32)
    o = o + b2_ref[...]                               # bias add in f32
    out_ref[...] = jnp.tanh(o)                        # tanh in f32 (EUP)


def prep_params(w1, b1, w2, b2):
    """One-time parameter prep (do NOT call per forward).
    w1: [32,128], b1: [128], w2: [128,784], b2: [784]."""
    w1_bf = w1.astype(jnp.bfloat16)
    w2_bf = w2.astype(jnp.bfloat16)
    b1_2d = b1.reshape(1, HIDDEN_DIM).astype(jnp.float32)
    b2_2d = b2.reshape(1, IMAGE_DIM).astype(jnp.float32)
    return w1_bf, b1_2d, w2_bf, b2_2d


def generator_forward(x, w1_bf, b1_2d, w2_bf, b2_2d):
    """x: [B, NOISE_DIM] f32. Params from prep_params(). Returns [B, 784] f32."""
    B = x.shape[0]
    TM, B_pad = _choose_tiling(B)

    x_in = x
    if B_pad != B:
        x_in = jnp.pad(x, ((0, B_pad - B), (0, 0)))   # tiny (B x 32 f32)

    grid = (B_pad // TM,)

    out = pl.pallas_call(
        generator_kernel,
        out_shape=jax.ShapeDtypeStruct((B_pad, IMAGE_DIM), jnp.float32),
        grid=grid,
        in_specs=[
            pl.BlockSpec((TM, NOISE_DIM), lambda i: (i, 0)),              # x tile
            pl.BlockSpec((NOISE_DIM, HIDDEN_DIM), lambda i: (0, 0)),      # w1 (resident)
            pl.BlockSpec((1, HIDDEN_DIM), lambda i: (0, 0)),              # b1 (resident)
            pl.BlockSpec((HIDDEN_DIM, IMAGE_DIM), lambda i: (0, 0)),      # w2 (resident)
            pl.BlockSpec((1, IMAGE_DIM), lambda i: (0, 0)),               # b2 (resident)
        ],
        out_specs=pl.BlockSpec((TM, IMAGE_DIM), lambda i: (i, 0)),
        compiler_params=pltpu.CompilerParams(
            dimension_semantics=("parallel",),   # megacore batch sharding
        ),
    )(x_in, w1_bf, b1_2d, w2_bf, b2_2d)

    if B_pad != B:
        out = out[:B]
    return out


def init_params(key):
    """Deterministic init mimicking nn.Linear's U(-1/sqrt(fan_in), 1/sqrt(fan_in))."""
    k1, k2, k3, k4 = jax.random.split(key, 4)
    bound1 = 1.0 / jnp.sqrt(NOISE_DIM)
    bound2 = 1.0 / jnp.sqrt(HIDDEN_DIM)
    w1 = jax.random.uniform(k1, (NOISE_DIM, HIDDEN_DIM), jnp.float32, -bound1, bound1)
    b1 = jax.random.uniform(k2, (HIDDEN_DIM,), jnp.float32, -bound1, bound1)
    w2 = jax.random.uniform(k3, (HIDDEN_DIM, IMAGE_DIM), jnp.float32, -bound2, bound2)
    b2 = jax.random.uniform(k4, (IMAGE_DIM,), jnp.float32, -bound2, bound2)
    return w1, b1, w2, b2


if __name__ == "__main__":
    key = jax.random.PRNGKey(0)
    k_params, k_x = jax.random.split(key)

    batch = 8
    x = jax.random.normal(k_x, (batch, NOISE_DIM), dtype=jnp.float32)
    w1, b1, w2, b2 = init_params(k_params)

    # One-time parameter prep (hoisted out of the per-call forward path).
    prepped = prep_params(w1, b1, w2, b2)

    fwd = jax.jit(generator_forward)
    out = fwd(x, *prepped)
    out = jax.block_until_ready(out)

    # Reference in plain JAX (f32 math). Kernel uses bf16 MXU inputs with f32
    # accumulation, so allow a small absolute tolerance on tanh outputs.
    h_ref = x @ w1 + b1
    h_ref = jnp.where(h_ref >= 0.0, h_ref, 0.01 * h_ref)
    ref = jnp.tanh(h_ref @ w2 + b2)
    assert out.shape == (batch, IMAGE_DIM)
    assert jnp.allclose(out, ref, atol=3e-2, rtol=0.0), float(
        jnp.max(jnp.abs(out - ref)))

    print("KERNEL_OK")
</pallas_src>

<mosaic_0001>
module attributes {stable_mosaic.version = 11 : i64} {
  func.func @generator_kernel(%arg0: i32, %arg1: memref<16x32xf32, #tpu.memory_space<vmem>>, %arg2: memref<32x128xbf16, #tpu.memory_space<vmem>>, %arg3: memref<1x128xf32, #tpu.memory_space<vmem>>, %arg4: memref<128x784xbf16, #tpu.memory_space<vmem>>, %arg5: memref<1x784xf32, #tpu.memory_space<vmem>>, %arg6: memref<16x784xf32, #tpu.memory_space<vmem>>) attributes {dimension_semantics = [#tpu.dimension_semantics<parallel>], iteration_bounds = array<i64: 1>, scalar_prefetch = 0 : i64, scratch_operands = 0 : i64, tpu.core_type = #tpu.core_type<tc>, window_params = [{transform_indices = @transform_0, window_bounds = array<i64: 16, 32>}, {pipeline_mode = #tpu.pipeline_mode<synchronous>, transform_indices = @transform_1, window_bounds = array<i64: 32, 128>}, {pipeline_mode = #tpu.pipeline_mode<synchronous>, transform_indices = @transform_2, window_bounds = array<i64: 1, 128>}, {pipeline_mode = #tpu.pipeline_mode<synchronous>, transform_indices = @transform_3, window_bounds = array<i64: 128, 784>}, {pipeline_mode = #tpu.pipeline_mode<synchronous>, transform_indices = @transform_4, window_bounds = array<i64: 1, 784>}, {transform_indices = @transform_5, window_bounds = array<i64: 16, 784>}]} {
    %c0 = arith.constant 0 : index
    %c0_0 = arith.constant 0 : index
    %0 = vector.load %arg1[%c0, %c0_0] : memref<16x32xf32, #tpu.memory_space<vmem>>, vector<16x32xf32>
    %1 = arith.truncf %0 : vector<16x32xf32> to vector<16x32xbf16>
    %c0_1 = arith.constant 0 : index
    %c0_2 = arith.constant 0 : index
    %2 = vector.load %arg2[%c0_1, %c0_2] : memref<32x128xbf16, #tpu.memory_space<vmem>>, vector<32x128xbf16>
    %cst = arith.constant dense<0.000000e+00> : vector<16x128xf32>
    %3 = tpu.matmul %1, %2, %cst {dimension_numbers = #tpu.dot_dimension_numbers<[1], [0], [0], [1], [0, 0, 1, 1], [], []>} : vector<16x32xbf16>, vector<32x128xbf16>, vector<16x128xf32> -> vector<16x128xf32>
    %c0_3 = arith.constant 0 : index
    %c0_4 = arith.constant 0 : index
    %4 = vector.load %arg3[%c0_3, %c0_4] : memref<1x128xf32, #tpu.memory_space<vmem>>, vector<1x128xf32>
    %5 = vector.broadcast %4 : vector<1x128xf32> to vector<16x128xf32>
    %6 = arith.addf %3, %5 : vector<16x128xf32>
    %cst_5 = arith.constant 0.000000e+00 : f32
    %7 = vector.broadcast %cst_5 : f32 to vector<16x128xf32>
    %8 = arith.cmpf oge, %6, %7 : vector<16x128xf32>
    %cst_6 = arith.constant 0.00999999977 : f32
    %9 = vector.broadcast %cst_6 : f32 to vector<16x128xf32>
    %10 = arith.mulf %9, %6 : vector<16x128xf32>
    %11 = arith.select %8, %6, %10 : vector<16x128xi1>, vector<16x128xf32>
    %12 = arith.truncf %11 : vector<16x128xf32> to vector<16x128xbf16>
    %c0_7 = arith.constant 0 : index
    %c0_8 = arith.constant 0 : index
    %13 = vector.load %arg4[%c0_7, %c0_8] : memref<128x784xbf16, #tpu.memory_space<vmem>>, vector<128x784xbf16>
    %cst_9 = arith.constant dense<0.000000e+00> : vector<16x784xf32>
    %14 = tpu.matmul %12, %13, %cst_9 {dimension_numbers = #tpu.dot_dimension_numbers<[1], [0], [0], [1], [0, 0, 1, 1], [], []>} : vector<16x128xbf16>, vector<128x784xbf16>, vector<16x784xf32> -> vector<16x784xf32>
    %c0_10 = arith.constant 0 : index
    %c0_11 = arith.constant 0 : index
    %15 = vector.load %arg5[%c0_10, %c0_11] : memref<1x784xf32, #tpu.memory_space<vmem>>, vector<1x784xf32>
    %16 = vector.broadcast %15 : vector<1x784xf32> to vector<16x784xf32>
    %17 = arith.addf %14, %16 : vector<16x784xf32>
    %18 = math.tanh %17 : vector<16x784xf32>
    %c0_12 = arith.constant 0 : index
    %c0_13 = arith.constant 0 : index
    %19 = vector.load %arg6[%c0_12, %c0_13] : memref<16x784xf32, #tpu.memory_space<vmem>>, vector<16x784xf32>
    tpu.vector_store %arg6[%c0_12, %c0_13], %18 {strides = array<i32>} : memref<16x784xf32, #tpu.memory_space<vmem>>, vector<16x784xf32>,
    return
  }
  func.func @transform_0(%arg0: i32) -> (i32, i32) {
    %c0_i32 = arith.constant 0 : i32
    %c0_i32_0 = arith.constant 0 : i32
    return %arg0, %c0_i32 : i32, i32
  }
  func.func @transform_1(%arg0: i32) -> (i32, i32) {
    %c0_i32 = arith.constant 0 : i32
    %c0_i32_0 = arith.constant 0 : i32
    %c0_i32_1 = arith.constant 0 : i32
    return %c0_i32, %c0_i32_0 : i32, i32
  }
  func.func @transform_2(%arg0: i32) -> (i32, i32) {
    %c0_i32 = arith.constant 0 : i32
    %c0_i32_0 = arith.constant 0 : i32
    %c0_i32_1 = arith.constant 0 : i32
    return %c0_i32, %c0_i32_0 : i32, i32
  }
  func.func @transform_3(%arg0: i32) -> (i32, i32) {
    %c0_i32 = arith.constant 0 : i32
    %c0_i32_0 = arith.constant 0 : i32
    %c0_i32_1 = arith.constant 0 : i32
    return %c0_i32, %c0_i32_0 : i32, i32
  }
  func.func @transform_4(%arg0: i32) -> (i32, i32) {
    %c0_i32 = arith.constant 0 : i32
    %c0_i32_0 = arith.constant 0 : i32
    %c0_i32_1 = arith.constant 0 : i32
    return %c0_i32, %c0_i32_0 : i32, i32
  }
  func.func @transform_5(%arg0: i32) -> (i32, i32) {
    %c0_i32 = arith.constant 0 : i32
    %c0_i32_0 = arith.constant 0 : i32
    return %arg0, %c0_i32 : i32, i32
  }
}

</mosaic_0001>

<llo_original>
// kernel: generator_forward.1
$region0: #{generator_forward.1}
  #allocation0 [shape = 'u32[]', space=smem, size = 0x4, offset = 0x4, fixed_abs, tag = 'smem constant byte address 0x4 - core index']
  #allocation1 [shape = 'u32[144,128]{1,0:T(1,128)}', space=vmem, size = 0x12000, scoped, tag = 'internal scratch']
  %s0 = inlined_call_operand.vmem [shape: f32[16,32], index: 0, kind: input, shape index: {}]
  %s1 = inlined_call_operand.vmem [shape: bf16[32,128], index: 1, kind: input, shape index: {}]
  %s2 = inlined_call_operand.vmem [shape: f32[1,128], index: 2, kind: input, shape index: {}]
  %s3 = inlined_call_operand.vmem [shape: bf16[128,784], index: 3, kind: input, shape index: {}]
  %s4 = inlined_call_operand.vmem [shape: f32[1,784], index: 4, kind: input, shape index: {}]
  %s5 = inlined_call_operand.vmem [shape: f32[16,784], index: 5, kind: output, shape index: {}]
  %s6 = sld [smem:[#allocation0]]
  $region30: #{generator_forward.1} parent=0
    _
  %s8 = ssub.s32 1, %s6
  %s9 = scalar_select 0, %s8, %s6
  // Predicated region
  $region2: #{generator_forward.1} parent=0 // pred_check
    _
  $region3: #{generator_forward.1} parent=0 // pred_check_branch
    %11 = sbr.rel (0) target = $region5
  $region4: #{generator_forward.1} parent=0 // pred_region
    _
  $region5: #{generator_forward.1} parent=0 // pred_fallthru
    _
  // Predicated region
  $region6: #{generator_forward.1} parent=0 // pred_check
    _
  $region7: #{generator_forward.1} parent=0 // pred_check_branch
    %13 = sbr.rel (0) target = $region9
  $region8: #{generator_forward.1} parent=0 // pred_region
    _
  $region9: #{generator_forward.1} parent=0 // pred_fallthru
    _
  // Predicated region
  $region10: #{generator_forward.1} parent=0 // pred_check
    _
  $region11: #{generator_forward.1} parent=0 // pred_check_branch
    %15 = sbr.rel (0) target = $region13
  $region12: #{generator_forward.1} parent=0 // pred_region
    _
  $region13: #{generator_forward.1} parent=0 // pred_fallthru
    _
  // Predicated region
  $region14: #{generator_forward.1} parent=0 // pred_check
    _
  $region15: #{generator_forward.1} parent=0 // pred_check_branch
    %17 = sbr.rel (0) target = $region17
  $region16: #{generator_forward.1} parent=0 // pred_region
    _
  $region17: #{generator_forward.1} parent=0 // pred_fallthru
    _
  // Predicated region
  $region18: #{generator_forward.1} parent=0 // pred_check
    _
  $region19: #{generator_forward.1} parent=0 // pred_check_branch
    %19 = sbr.rel (0) target = $region21
  $region20: #{generator_forward.1} parent=0 // pred_region
    _
  $region21: #{generator_forward.1} parent=0 // pred_fallthru
    _
  %v21 = vld [vmem:[%s0] sm:$0xff]
  %v22 = vld [vmem:[%s0 + $0x8] sm:$0xff]
  %v23 = vpack.c.bf16 %v22, %v21
  %v24 = vld [vmem:[%s1] sm:$0xf]
  %v25 = vld [vmem:[%s1 + $0x4] sm:$0xf]
  %v26 = vld [vmem:[%s1 + $0x8] sm:$0xf]
  %v27 = vld [vmem:[%s1 + $0xc] sm:$0xf]
  %v28 = vld [vmem:[%s2] sm:$0x1]
  %v30 = vlaneseq
  %v31 = vshrl.u32 %v30, 7
  %v32 = vsub.s32 0, %v31
  %v33 = vrot.slane %v28, %v32
  %v39 = vunpack.c.l.b16 %v24
  %v40 = vunpack.c.l.b16 %v25
  %v41 = vunpack.c.l.b16 %v26
  %v42 = vunpack.c.l.b16 %v27
  %v43 = vpack.c.b16 %v40, %v39
  %v44 = vpack.c.b16 %v42, %v41
  %vm47 = vcmask 261120
  %v49 = vsel %vm47, %v23, 0
  %51 = vmatprep.subr.bf16.mxu0 0
  %52 = vmatpush1.bf16.msra.mxu0 0
  %53 = vmatprep.subr.bf16.mxu0 0
  %54 = vmatpush1.bf16.msra.mxu0 0
  %55 = vmatprep.subr.bf16.mxu0 0
  %56 = vmatpush1.bf16.msra.mxu0 0
  %57 = vmatprep.subr.bf16.mxu0 0
  %58 = vmatpush1.bf16.msra.mxu0 0
  %59 = vmatprep.subr.bf16.mxu0 0
  %60 = vmatpush1.bf16.msra.mxu0 0
  %61 = vmatprep.subr.bf16.mxu0 0
  %62 = vmatpush1.bf16.msra.mxu0 0
  %63 = vmatprep.subr.bf16.mxu0 0
  %64 = vmatpush1.bf16.msra.mxu0 %v44
  %65 = vmatprep.subr.bf16.mxu0 0
  %66 = vmatpush1.bf16.msra.mxu0 %v43
  %67 = vmatprep.subr.bf16.mxu0 0
  %68 = vmatpush2.bf16.msra.mxu0 0
  %69 = vmatprep.subr.bf16.mxu0 0
  %70 = vmatpush2.bf16.msra.mxu0 0
  %71 = vmatprep.subr.bf16.mxu0 0
  %72 = vmatpush2.bf16.msra.mxu0 0
  %73 = vmatprep.subr.bf16.mxu0 0
  %74 = vmatpush2.bf16.msra.mxu0 0
  %75 = vmatprep.subr.bf16.mxu0 0
  %76 = vmatpush2.bf16.msra.mxu0 0
  %77 = vmatprep.subr.bf16.mxu0 0
  %78 = vmatpush2.bf16.msra.mxu0 0
  %79 = vmatprep.subr.bf16.mxu0 0
  %80 = vmatpush2.bf16.msra.mxu0 0
  %81 = vmatprep.subr.bf16.mxu0 0
  %82 = vmatpush2.bf16.msra.mxu0 0
  %83 = vmatprep.mubr.bf16.mxu0 0
  %84 = vmatmul.mubr.bf16.gmra.mxu0 %v49
  %v85 = vpop.f32.mrf.mxu0
  %v86 = vadd.f32 %v33, %v85
  %v87 = vpop.f32.mrf.mxu0
  %v88 = vpop.f32.mrf.mxu0
  %v89 = vadd.f32 %v33, %v88
  %v90 = vpop.f32.mrf.mxu0
  %91 = vdwg.mxu0
  %vm92 = vcmp.ge.f32.partialorder %v86, 0.0
  %vm93 = vcmp.ge.f32.partialorder %v89, 0.0
  %v94 = vmul.f32 %v86, 0.01
  %v95 = vmul.f32 %v89, 0.01
  %v96 = vsel %vm92, %v86, %v94
  %v97 = vsel %vm93, %v89, %v95
  %v98 = vpack.c.bf16 %v97, %v96
  %v99 = vld [vmem:[%s3] sm:$0xff]
  %v100 = vld [vmem:[%s3 + $0x8] sm:$0xff]
  %v101 = vld [vmem:[%s3 + $0x10] sm:$0xff]
  %v102 = vld [vmem:[%s3 + $0x18] sm:$0xf]
  %v103 = vld [vmem:[%s3 + $0x1c] sm:$0xff]
  %v104 = vld [vmem:[%s3 + $0x24] sm:$0xff]
  %v105 = vld [vmem:[%s3 + $0x2c] sm:$0xff]
  %v106 = vld [vmem:[%s3 + $0x34] sm:$0xf]
  %v107 = vld [vmem:[%s3 + $0x38] sm:$0xff]
  %v108 = vld [vmem:[%s3 + $0x40] sm:$0xff]
  %v109 = vld [vmem:[%s3 + $0x48] sm:$0xff]
  %v110 = vld [vmem:[%s3 + $0x50] sm:$0xf]
  %v111 = vld [vmem:[%s3 + $0x54] sm:$0xff]
  %v112 = vld [vmem:[%s3 + $0x5c] sm:$0xff]
  %v113 = vld [vmem:[%s3 + $0x64] sm:$0xff]
  %v114 = vld [vmem:[%s3 + $0x6c] sm:$0xf]
  %v115 = vld [vmem:[%s3 + $0x70] sm:$0xff]
  %v116 = vld [vmem:[%s3 + $0x78] sm:$0xff]
  %v117 = vld [vmem:[%s3 + $0x80] sm:$0xff]
  %v118 = vld [vmem:[%s3 + $0x88] sm:$0xf]
  %v119 = vld [vmem:[%s3 + $0x8c] sm:$0xff]
  %v120 = vld [vmem:[%s3 + $0x94] sm:$0xff]
  %v121 = vld [vmem:[%s3 + $0x9c] sm:$0xff]
  %v122 = vld [vmem:[%s3 + $0xa4] sm:$0xf]
  %v123 = vld [vmem:[%s3 + $0xa8] sm:$0xff]
  %v124 = vld [vmem:[%s3 + $0xb0] sm:$0xff]
  %v125 = vld [vmem:[%s3 + $0xb8] sm:$0xff]
  %v126 = vld [vmem:[%s3 + $0xc0] sm:$0xf]
  %v127 = vld [vmem:[%s3 + $0xc4] sm:$0xff]
  %v128 = vld [vmem:[%s3 + $0xcc] sm:$0xff]
  %v129 = vld [vmem:[%s3 + $0xd4] sm:$0xff]
  %v130 = vld [vmem:[%s3 + $0xdc] sm:$0xf]
  %v131 = vld [vmem:[%s3 + $0xe0] sm:$0xff]
  %v132 = vld [vmem:[%s3 + $0xe8] sm:$0xff]
  %v133 = vld [vmem:[%s3 + $0xf0] sm:$0xff]
  %v134 = vld [vmem:[%s3 + $0xf8] sm:$0xf]
  %v135 = vld [vmem:[%s3 + $0xfc] sm:$0xff]
  %v136 = vld [vmem:[%s3 + $0x104] sm:$0xff]
  %v137 = vld [vmem:[%s3 + $0x10c] sm:$0xff]
  %v138 = vld [vmem:[%s3 + $0x114] sm:$0xf]
  %v139 = vld [vmem:[%s3 + $0x118] sm:$0xff]
  %v140 = vld [vmem:[%s3 + $0x120] sm:$0xff]
  %v141 = vld [vmem:[%s3 + $0x128] sm:$0xff]
  %v142 = vld [vmem:[%s3 + $0x130] sm:$0xf]
  %v143 = vld [vmem:[%s3 + $0x134] sm:$0xff]
  %v144 = vld [vmem:[%s3 + $0x13c] sm:$0xff]
  %v145 = vld [vmem:[%s3 + $0x144] sm:$0xff]
  %v146 = vld [vmem:[%s3 + $0x14c] sm:$0xf]
  %v147 = vld [vmem:[%s3 + $0x150] sm:$0xff]
  %v148 = vld [vmem:[%s3 + $0x158] sm:$0xff]
  %v149 = vld [vmem:[%s3 + $0x160] sm:$0xff]
  %v150 = vld [vmem:[%s3 + $0x168] sm:$0xf]
  %v151 = vld [vmem:[%s3 + $0x16c] sm:$0xff]
  %v152 = vld [vmem:[%s3 + $0x174] sm:$0xff]
  %v153 = vld [vmem:[%s3 + $0x17c] sm:$0xff]
  %v154 = vld [vmem:[%s3 + $0x184] sm:$0xf]
  %v155 = vld [vmem:[%s3 + $0x188] sm:$0xff]
  %v156 = vld [vmem:[%s3 + $0x190] sm:$0xff]
  %v157 = vld [vmem:[%s3 + $0x198] sm:$0xff]
  %v158 = vld [vmem:[%s3 + $0x1a0] sm:$0xf]
  %v159 = vld [vmem:[%s3 + $0x1a4] sm:$0xff]
  %v160 = vld [vmem:[%s3 + $0x1ac] sm:$0xff]
  %v161 = vld [vmem:[%s3 + $0x1b4] sm:$0xff]
  %v162 = vld [vmem:[%s3 + $0x1bc] sm:$0xf]
  %v163 = vld [vmem:[%s4] sm:$0x7f]
  %v165 = vlaneseq
  %v166 = vshrl.u32 %v165, 7
  %v167 = vsub.s32 0, %v166
  %v168 = vrot.slane %v163, %v167
  %v169 = vlaneseq
  %v170 = vshrl.u32 %v169, 7
  %v171 = vsub.s32 1, %v170
  %v172 = vrot.slane %v163, %v171
  %v173 = vlaneseq
  %v174 = vshrl.u32 %v173, 7
  %v175 = vsub.s32 2, %v174
  %v176 = vrot.slane %v163, %v175
  %v177 = vlaneseq
  %v178 = vshrl.u32 %v177, 7
  %v179 = vsub.s32 3, %v178
  %v180 = vrot.slane %v163, %v179
  %v181 = vlaneseq
  %v182 = vshrl.u32 %v181, 7
  %v183 = vsub.s32 4, %v182
  %v184 = vrot.slane %v163, %v183
  %v185 = vlaneseq
  %v186 = vshrl.u32 %v185, 7
  %v187 = vsub.s32 5, %v186
  %v188 = vrot.slane %v163, %v187
  %v189 = vlaneseq
  %v190 = vshrl.u32 %v189, 7
  %v191 = vsub.s32 6, %v190
  %v192 = vrot.slane %v163, %v191
  %v264 = vunpack.c.l.b16 %v99
  %v265 = vunpack.c.h.b16 %v99
  %v266 = vunpack.c.l.b16 %v100
  %v267 = vunpack.c.h.b16 %v100
  %v268 = vunpack.c.l.b16 %v101
  %v269 = vunpack.c.h.b16 %v101
  %v270 = vunpack.c.l.b16 %v102
  %v271 = vunpack.c.l.b16 %v103
  %v272 = vunpack.c.h.b16 %v103
  %v273 = vunpack.c.l.b16 %v104
  %v274 = vunpack.c.h.b16 %v104
  %v275 = vunpack.c.l.b16 %v105
  %v276 = vunpack.c.h.b16 %v105
  %v277 = vunpack.c.l.b16 %v106
  %v278 = vunpack.c.l.b16 %v107
  %v279 = vunpack.c.h.b16 %v107
  %v280 = vunpack.c.l.b16 %v108
  %v281 = vunpack.c.h.b16 %v108
  %v282 = vunpack.c.l.b16 %v109
  %v283 = vunpack.c.h.b16 %v109
  %v284 = vunpack.c.l.b16 %v110
  %v285 = vunpack.c.l.b16 %v111
  %v286 = vunpack.c.h.b16 %v111
  %v287 = vunpack.c.l.b16 %v112
  %v288 = vunpack.c.h.b16 %v112
  %v289 = vunpack.c.l.b16 %v113
  %v290 = vunpack.c.h.b16 %v113
  %v291 = vunpack.c.l.b16 %v114
  %v292 = vunpack.c.l.b16 %v115
  %v293 = vunpack.c.h.b16 %v115
  %v294 = vunpack.c.l.b16 %v116
  %v295 = vunpack.c.h.b16 %v116
  %v296 = vunpack.c.l.b16 %v117
  %v297 = vunpack.c.h.b16 %v117
  %v298 = vunpack.c.l.b16 %v118
  %v299 = vunpack.c.l.b16 %v119
  %v300 = vunpack.c.h.b16 %v119
  %v301 = vunpack.c.l.b16 %v120
  %v302 = vunpack.c.h.b16 %v120
  %v303 = vunpack.c.l.b16 %v121
  %v304 = vunpack.c.h.b16 %v121
  %v305 = vunpack.c.l.b16 %v122
  %v306 = vunpack.c.l.b16 %v123
  %v307 = vunpack.c.h.b16 %v123
  %v308 = vunpack.c.l.b16 %v124
  %v309 = vunpack.c.h.b16 %v124
  %v310 = vunpack.c.l.b16 %v125
  %v311 = vunpack.c.h.b16 %v125
  %v312 = vunpack.c.l.b16 %v126
  %v313 = vunpack.c.l.b16 %v127
  %v314 = vunpack.c.h.b16 %v127
  %v315 = vunpack.c.l.b16 %v128
  %v316 = vunpack.c.h.b16 %v128
  %v317 = vunpack.c.l.b16 %v129
  %v318 = vunpack.c.h.b16 %v129
  %v319 = vunpack.c.l.b16 %v130
  %v320 = vunpack.c.l.b16 %v131
  %v321 = vunpack.c.h.b16 %v131
  %v322 = vunpack.c.l.b16 %v132
  %v323 = vunpack.c.h.b16 %v132
  %v324 = vunpack.c.l.b16 %v133
  %v325 = vunpack.c.h.b16 %v133
  %v326 = vunpack.c.l.b16 %v134
  %v327 = vunpack.c.l.b16 %v135
  %v328 = vunpack.c.h.b16 %v135
  %v329 = vunpack.c.l.b16 %v136
  %v330 = vunpack.c.h.b16 %v136
  %v331 = vunpack.c.l.b16 %v137
  %v332 = vunpack.c.h.b16 %v137
  %v333 = vunpack.c.l.b16 %v138
  %v334 = vunpack.c.l.b16 %v139
  %v335 = vunpack.c.h.b16 %v139
  %v336 = vunpack.c.l.b16 %v140
  %v337 = vunpack.c.h.b16 %v140
  %v338 = vunpack.c.l.b16 %v141
  %v339 = vunpack.c.h.b16 %v141
  %v340 = vunpack.c.l.b16 %v142
  %v341 = vunpack.c.l.b16 %v143
  %v342 = vunpack.c.h.b16 %v143
  %v343 = vunpack.c.l.b16 %v144
  %v344 = vunpack.c.h.b16 %v144
  %v345 = vunpack.c.l.b16 %v145
  %v346 = vunpack.c.h.b16 %v145
  %v347 = vunpack.c.l.b16 %v146
  %v348 = vunpack.c.l.b16 %v147
  %v349 = vunpack.c.h.b16 %v147
  %v350 = vunpack.c.l.b16 %v148
  %v351 = vunpack.c.h.b16 %v148
  %v352 = vunpack.c.l.b16 %v149
  %v353 = vunpack.c.h.b16 %v149
  %v354 = vunpack.c.l.b16 %v150
  %v355 = vunpack.c.l.b16 %v151
  %v356 = vunpack.c.h.b16 %v151
  %v357 = vunpack.c.l.b16 %v152
  %v358 = vunpack.c.h.b16 %v152
  %v359 = vunpack.c.l.b16 %v153
  %v360 = vunpack.c.h.b16 %v153
  %v361 = vunpack.c.l.b16 %v154
  %v362 = vunpack.c.l.b16 %v155
  %v363 = vunpack.c.h.b16 %v155
  %v364 = vunpack.c.l.b16 %v156
  %v365 = vunpack.c.h.b16 %v156
  %v366 = vunpack.c.l.b16 %v157
  %v367 = vunpack.c.h.b16 %v157
  %v368 = vunpack.c.l.b16 %v158
  %v369 = vunpack.c.l.b16 %v159
  %v370 = vunpack.c.h.b16 %v159
  %v371 = vunpack.c.l.b16 %v160
  %v372 = vunpack.c.h.b16 %v160
  %v373 = vunpack.c.l.b16 %v161
  %v374 = vunpack.c.h.b16 %v161
  %v375 = vunpack.c.l.b16 %v162
  %v376 = vpack.c.b16 %v271, %v264
  %v377 = vpack.c.b16 %v272, %v265
  %v378 = vpack.c.b16 %v273, %v266
  %v379 = vpack.c.b16 %v274, %v267
  %v380 = vpack.c.b16 %v275, %v268
  %v381 = vpack.c.b16 %v276, %v269
  %v382 = vpack.c.b16 %v277, %v270
  %v383 = vpack.c.b16 %v285, %v278
  %v384 = vpack.c.b16 %v286, %v279
  %v385 = vpack.c.b16 %v287, %v280
  %v386 = vpack.c.b16 %v288, %v281
  %v387 = vpack.c.b16 %v289, %v282
  %v388 = vpack.c.b16 %v290, %v283
  %v389 = vpack.c.b16 %v291, %v284
  %v390 = vpack.c.b16 %v299, %v292
  %v391 = vpack.c.b16 %v300, %v293
  %v392 = vpack.c.b16 %v301, %v294
  %v393 = vpack.c.b16 %v302, %v295
  %v394 = vpack.c.b16 %v303, %v296
  %v395 = vpack.c.b16 %v304, %v297
  %v396 = vpack.c.b16 %v305, %v298
  %v397 = vpack.c.b16 %v313, %v306
  %v398 = vpack.c.b16 %v314, %v307
  %v399 = vpack.c.b16 %v315, %v308
  %v400 = vpack.c.b16 %v316, %v309
  %v401 = vpack.c.b16 %v317, %v310
  %v402 = vpack.c.b16 %v318, %v311
  %v403 = vpack.c.b16 %v319, %v312
  %v404 = vpack.c.b16 %v327, %v320
  %v405 = vpack.c.b16 %v328, %v321
  %v406 = vpack.c.b16 %v329, %v322
  %v407 = vpack.c.b16 %v330, %v323
  %v408 = vpack.c.b16 %v331, %v324
  %v409 = vpack.c.b16 %v332, %v325
  %v410 = vpack.c.b16 %v333, %v326
  %v411 = vpack.c.b16 %v341, %v334
  %v412 = vpack.c.b16 %v342, %v335
  %v413 = vpack.c.b16 %v343, %v336
  %v414 = vpack.c.b16 %v344, %v337
  %v415 = vpack.c.b16 %v345, %v338
  %v416 = vpack.c.b16 %v346, %v339
  %v417 = vpack.c.b16 %v347, %v340
  %v418 = vpack.c.b16 %v355, %v348
  %v419 = vpack.c.b16 %v356, %v349
  %v420 = vpack.c.b16 %v357, %v350
  %v421 = vpack.c.b16 %v358, %v351
  %v422 = vpack.c.b16 %v359, %v352
  %v423 = vpack.c.b16 %v360, %v353
  %v424 = vpack.c.b16 %v361, %v354
  %v425 = vpack.c.b16 %v369, %v362
  %v426 = vpack.c.b16 %v370, %v363
  %v427 = vpack.c.b16 %v371, %v364
  %v428 = vpack.c.b16 %v372, %v365
  %v429 = vpack.c.b16 %v373, %v366
  %v430 = vpack.c.b16 %v374, %v367
  %v431 = vpack.c.b16 %v375, %v368
  %488 = vmatprep.subr.bf16.mxu0 %v426
  %489 = vmatpush1.bf16.msra.mxu0 %v425
  %490 = vmatprep.subr.bf16.mxu0 %v419
  %491 = vmatpush1.bf16.msra.mxu0 %v418
  %492 = vmatprep.subr.bf16.mxu0 %v412
  %493 = vmatpush1.bf16.msra.mxu0 %v411
  %494 = vmatprep.subr.bf16.mxu0 %v405
  %495 = vmatpush1.bf16.msra.mxu0 %v404
  %496 = vmatprep.subr.bf16.mxu0 %v398
  %497 = vmatpush1.bf16.msra.mxu0 %v397
  %498 = vmatprep.subr.bf16.mxu0 %v391
  %499 = vmatpush1.bf16.msra.mxu0 %v390
  %500 = vmatprep.subr.bf16.mxu0 %v384
  %501 = vmatpush1.bf16.msra.mxu0 %v383
  %502 = vmatprep.subr.bf16.mxu0 %v377
  %503 = vmatpush1.bf16.msra.mxu0 %v376
  %504 = vmatprep.subr.bf16.mxu0 0
  %505 = vmatpush2.bf16.msra.mxu0 0
  %506 = vmatprep.subr.bf16.mxu0 0
  %507 = vmatpush2.bf16.msra.mxu0 0
  %508 = vmatprep.subr.bf16.mxu0 0
  %509 = vmatpush2.bf16.msra.mxu0 0
  %510 = vmatprep.subr.bf16.mxu0 0
  %511 = vmatpush2.bf16.msra.mxu0 0
  %512 = vmatprep.subr.bf16.mxu0 0
  %513 = vmatpush2.bf16.msra.mxu0 0
  %514 = vmatprep.subr.bf16.mxu0 0
  %515 = vmatpush2.bf16.msra.mxu0 0
  %516 = vmatprep.subr.bf16.mxu0 0
  %517 = vmatpush2.bf16.msra.mxu0 0
  %518 = vmatprep.subr.bf16.mxu0 0
  %519 = vmatpush2.bf16.msra.mxu0 0
  %520 = vmatprep.mubr.bf16.mxu0 0
  %521 = vmatmul.mubr.bf16.gmra.mxu0 %v98
  %v522 = vpop.f32.mrf.mxu0
  %v523 = vadd.f32 %v168, %v522
  %v524 = vpop.f32.mrf.mxu0
  %v525 = vadd.f32 %v172, %v524
  %v526 = vpop.f32.mrf.mxu0
  %v527 = vadd.f32 %v168, %v526
  %v528 = vpop.f32.mrf.mxu0
  %v529 = vadd.f32 %v172, %v528
  %530 = vdwg.mxu0
  %531 = vmatprep.subr.bf16.mxu0 %v428
  %532 = vmatpush1.bf16.msra.mxu0 %v427
  %533 = vmatprep.subr.bf16.mxu0 %v421
  %534 = vmatpush1.bf16.msra.mxu0 %v420
  %535 = vmatprep.subr.bf16.mxu0 %v414
  %536 = vmatpush1.bf16.msra.mxu0 %v413
  %537 = vmatprep.subr.bf16.mxu0 %v407
  %538 = vmatpush1.bf16.msra.mxu0 %v406
  %539 = vmatprep.subr.bf16.mxu0 %v400
  %540 = vmatpush1.bf16.msra.mxu0 %v399
  %541 = vmatprep.subr.bf16.mxu0 %v393
  %542 = vmatpush1.bf16.msra.mxu0 %v392
  %543 = vmatprep.subr.bf16.mxu0 %v386
  %544 = vmatpush1.bf16.msra.mxu0 %v385
  %545 = vmatprep.subr.bf16.mxu0 %v379
  %546 = vmatpush1.bf16.msra.mxu0 %v378
  %547 = vmatprep.subr.bf16.mxu0 0
  %548 = vmatpush2.bf16.msra.mxu0 0
  %549 = vmatprep.subr.bf16.mxu0 0
  %550 = vmatpush2.bf16.msra.mxu0 0
  %551 = vmatprep.subr.bf16.mxu0 0
  %552 = vmatpush2.bf16.msra.mxu0 0
  %553 = vmatprep.subr.bf16.mxu0 0
  %554 = vmatpush2.bf16.msra.mxu0 0
  %555 = vmatprep.subr.bf16.mxu0 0
  %556 = vmatpush2.bf16.msra.mxu0 0
  %557 = vmatprep.subr.bf16.mxu0 0
  %558 = vmatpush2.bf16.msra.mxu0 0
  %559 = vmatprep.subr.bf16.mxu0 0
  %560 = vmatpush2.bf16.msra.mxu0 0
  %561 = vmatprep.subr.bf16.mxu0 0
  %562 = vmatpush2.bf16.msra.mxu0 0
  %563 = vmatprep.mubr.bf16.mxu0 0
  %564 = vmatmul.mubr.bf16.gmra.mxu0 %v98
  %v565 = vpop.f32.mrf.mxu0
  %v566 = vadd.f32 %v176, %v565
  %v567 = vpop.f32.mrf.mxu0
  %v568 = vadd.f32 %v180, %v567
  %v569 = vpop.f32.mrf.mxu0
  %v570 = vadd.f32 %v176, %v569
  %v571 = vpop.f32.mrf.mxu0
  %v572 = vadd.f32 %v180, %v571
  %573 = vdwg.mxu0
  %574 = vmatprep.subr.bf16.mxu0 %v430
  %575 = vmatpush1.bf16.msra.mxu0 %v429
  %576 = vmatprep.subr.bf16.mxu0 %v423
  %577 = vmatpush1.bf16.msra.mxu0 %v422
  %578 = vmatprep.subr.bf16.mxu0 %v416
  %579 = vmatpush1.bf16.msra.mxu0 %v415
  %580 = vmatprep.subr.bf16.mxu0 %v409
  %581 = vmatpush1.bf16.msra.mxu0 %v408
  %582 = vmatprep.subr.bf16.mxu0 %v402
  %583 = vmatpush1.bf16.msra.mxu0 %v401
  %584 = vmatprep.subr.bf16.mxu0 %v395
  %585 = vmatpush1.bf16.msra.mxu0 %v394
  %586 = vmatprep.subr.bf16.mxu0 %v388
  %587 = vmatpush1.bf16.msra.mxu0 %v387
  %588 = vmatprep.subr.bf16.mxu0 %v381
  %589 = vmatpush1.bf16.msra.mxu0 %v380
  %590 = vmatprep.subr.bf16.mxu0 0
  %591 = vmatpush2.bf16.msra.mxu0 0
  %592 = vmatprep.subr.bf16.mxu0 0
  %593 = vmatpush2.bf16.msra.mxu0 0
  %594 = vmatprep.subr.bf16.mxu0 0
  %595 = vmatpush2.bf16.msra.mxu0 0
  %596 = vmatprep.subr.bf16.mxu0 0
  %597 = vmatpush2.bf16.msra.mxu0 0
  %598 = vmatprep.subr.bf16.mxu0 0
  %599 = vmatpush2.bf16.msra.mxu0 0
  %600 = vmatprep.subr.bf16.mxu0 0
  %601 = vmatpush2.bf16.msra.mxu0 0
  %602 = vmatprep.subr.bf16.mxu0 0
  %603 = vmatpush2.bf16.msra.mxu0 0
  %604 = vmatprep.subr.bf16.mxu0 0
  %605 = vmatpush2.bf16.msra.mxu0 0
  %606 = vmatprep.mubr.bf16.mxu0 0
  %607 = vmatmul.mubr.bf16.gmra.mxu0 %v98
  %v608 = vpop.f32.mrf.mxu0
  %v609 = vadd.f32 %v184, %v608
  %v610 = vpop.f32.mrf.mxu0
  %v611 = vadd.f32 %v188, %v610
  %v612 = vpop.f32.mrf.mxu0
  %v613 = vadd.f32 %v184, %v612
  %v614 = vpop.f32.mrf.mxu0
  %v615 = vadd.f32 %v188, %v614
  %616 = vdwg.mxu0
  %617 = vmatprep.subr.bf16.mxu0 0
  %618 = vmatpush1.bf16.msra.mxu0 %v431
  %619 = vmatprep.subr.bf16.mxu0 0
  %620 = vmatpush1.bf16.msra.mxu0 %v424
  %621 = vmatprep.subr.bf16.mxu0 0
  %622 = vmatpush1.bf16.msra.mxu0 %v417
  %623 = vmatprep.subr.bf16.mxu0 0
  %624 = vmatpush1.bf16.msra.mxu0 %v410
  %625 = vmatprep.subr.bf16.mxu0 0
  %626 = vmatpush1.bf16.msra.mxu0 %v403
  %627 = vmatprep.subr.bf16.mxu0 0
  %628 = vmatpush1.bf16.msra.mxu0 %v396
  %629 = vmatprep.subr.bf16.mxu0 0
  %630 = vmatpush1.bf16.msra.mxu0 %v389
  %631 = vmatprep.subr.bf16.mxu0 0
  %632 = vmatpush1.bf16.msra.mxu0 %v382
  %633 = vmatprep.subr.bf16.mxu0 0
  %634 = vmatpush2.bf16.msra.mxu0 0
  %635 = vmatprep.subr.bf16.mxu0 0
  %636 = vmatpush2.bf16.msra.mxu0 0
  %637 = vmatprep.subr.bf16.mxu0 0
  %638 = vmatpush2.bf16.msra.mxu0 0
  %639 = vmatprep.subr.bf16.mxu0 0
  %640 = vmatpush2.bf16.msra.mxu0 0
  %641 = vmatprep.subr.bf16.mxu0 0
  %642 = vmatpush2.bf16.msra.mxu0 0
  %643 = vmatprep.subr.bf16.mxu0 0
  %644 = vmatpush2.bf16.msra.mxu0 0
  %645 = vmatprep.subr.bf16.mxu0 0
  %646 = vmatpush2.bf16.msra.mxu0 0
  %647 = vmatprep.subr.bf16.mxu0 0
  %648 = vmatpush2.bf16.msra.mxu0 0
  %649 = vmatprep.mubr.bf16.mxu0 0
  %650 = vmatmul.mubr.bf16.gmra.mxu0 %v98
  %v651 = vpop.f32.mrf.mxu0
  %v652 = vadd.f32 %v192, %v651
  %v653 = vpop.f32.mrf.mxu0
  %v654 = vpop.f32.mrf.mxu0
  %v655 = vadd.f32 %v192, %v654
  %v656 = vpop.f32.mrf.mxu0
  %657 = vdwg.mxu0
  %v658 = vtanh.pop %v523
  %v659 = vtanh.pop %v525
  %v660 = vtanh.pop %v566
  %v661 = vtanh.pop %v568
  %v662 = vtanh.pop %v609
  %v663 = vtanh.pop %v611
  %v664 = vtanh.pop %v652
  %v665 = vtanh.pop %v527
  %v666 = vtanh.pop %v529
  %v667 = vtanh.pop %v570
  %v668 = vtanh.pop %v572
  %v669 = vtanh.pop %v613
  %v670 = vtanh.pop %v615
  %v671 = vtanh.pop %v655
  %672 = vst [vmem:[%s5] sm:$0xff] %v658
  %673 = vst [vmem:[%s5 + $0x8] sm:$0xff] %v659
  %674 = vst [vmem:[%s5 + $0x10] sm:$0xff] %v660
  %675 = vst [vmem:[%s5 + $0x18] sm:$0xff] %v661
  %676 = vst [vmem:[%s5 + $0x20] sm:$0xff] %v662
  %677 = vst [vmem:[%s5 + $0x28] sm:$0xff] %v663
  %vm678 = vcmask 130048
  %679 = vst.msk [vmem:[%s5 + $0x30] sm:$0xff] %vm678, %v664
  %680 = vst [vmem:[%s5 + $0x38] sm:$0xff] %v665
  %681 = vst [vmem:[%s5 + $0x40] sm:$0xff] %v666
  %682 = vst [vmem:[%s5 + $0x48] sm:$0xff] %v667
  %683 = vst [vmem:[%s5 + $0x50] sm:$0xff] %v668
  %684 = vst [vmem:[%s5 + $0x58] sm:$0xff] %v669
  %685 = vst [vmem:[%s5 + $0x60] sm:$0xff] %v670
  %686 = vst.msk [vmem:[%s5 + $0x68] sm:$0xff] %vm678, %v671
  // Predicated region
  $region22: #{generator_forward.1} parent=0 // pred_check
    _
  $region23: #{generator_forward.1} parent=0 // pred_check_branch
    %688 = sbr.rel (0) target = $region25
  $region24: #{generator_forward.1} parent=0 // pred_region
    _
  $region25: #{generator_forward.1} parent=0 // pred_fallthru
    _
  // Predicated region
  $region26: #{generator_forward.1} parent=0 // pred_check
    _
  $region27: #{generator_forward.1} parent=0 // pred_check_branch
    %690 = sbr.rel (0) target = $region29
  $region28: #{generator_forward.1} parent=0 // pred_region
    _
  $region29: #{generator_forward.1} parent=0 // pred_fallthru
    _

</llo_original>
